<compile_context>
chip_gen: v7x
topology: tpu7x:2x2x1
jax: 0.10.0
libtpu: 0.0.40
codegen_flags: <defaults>
</compile_context>

<pallas_src>
import jax
import jax.numpy as jnp
from jax.experimental import pallas as pl
from jax.experimental.pallas import tpu as pltpu  # noqa: F401  (kept for scale-up path)


def _exp_kernel(logvar_ref, var_ref):
    # var = exp(logvar); single full-array block, 2 vregs of EUP work.
    var_ref[...] = jnp.exp(logvar_ref[...])


def gmm_prior_forward(mu: jax.Array, logvar: jax.Array):
    """Pallas implementation of GMMPrior.forward(): returns (mu, exp(logvar)).

    mu is passed through untouched. logvar -> exp(logvar) runs as a single
    full-array block (no grid, no repack).
    """
    assert mu.shape == logvar.shape
    K, D = logvar.shape

    # If this parameter tensor ever grows to tens of MB, switch to a 1-D row
    # grid with ~(512, 128)-(1024, 128) blocks, a 128-multiple lane dim on the
    # out_spec, and dimension_semantics=("parallel",) (2-TC sharding on v7x,
    # VMEM budgeted against 64 MiB there). At the current size that is all
    # overhead, so we use one full-array block.
    spec = pl.BlockSpec((K, D), lambda: (0, 0))
    var = pl.pallas_call(
        _exp_kernel,
        out_shape=jax.ShapeDtypeStruct((K, D), logvar.dtype),
        in_specs=[spec],
        out_specs=spec,
        cost_estimate=pl.CostEstimate(
            flops=0,
            transcendentals=K * D,
            bytes_accessed=2 * logvar.dtype.itemsize * K * D,
        ),
    )(logvar)

    return mu, var


class GMMPriorPallas:
    """Learnable isotropic GMM prior with equal weights (JAX/Pallas version)."""

    def __init__(self, K: int, latent_dim: int, key: jax.Array):
        self.K = K
        self.latent_dim = latent_dim
        # Deterministic init mirroring the PyTorch module:
        #   mu ~ N(0, 1) * 0.05 ; logvar = zeros
        self.mu = jax.random.normal(key, (K, latent_dim), dtype=jnp.float32) * 0.05
        self.logvar = jnp.zeros((K, latent_dim), dtype=jnp.float32)

    def __call__(self):
        return gmm_prior_forward(self.mu, self.logvar)


if __name__ == "__main__":
    key = jax.random.PRNGKey(0)
    K, latent_dim = 8, 32  # small shapes consistent with the module

    prior = GMMPriorPallas(K, latent_dim, key)
    mu_out, var_out = prior()
    jax.block_until_ready((mu_out, var_out))

    # Reference check against plain JAX semantics of the PyTorch forward.
    ref_mu = prior.mu
    ref_var = jnp.exp(prior.logvar)
    assert mu_out.shape == (K, latent_dim) and var_out.shape == (K, latent_dim)
    assert jnp.allclose(mu_out, ref_mu, atol=1e-6)
    assert jnp.allclose(var_out, ref_var, atol=1e-6)

    # Also sanity-check a non-trivial logvar (non-zero values).
    k2 = jax.random.PRNGKey(1)
    lv = jax.random.normal(k2, (K, latent_dim), dtype=jnp.float32) * 0.3
    mu2, var2 = gmm_prior_forward(prior.mu, lv)
    jax.block_until_ready((mu2, var2))
    assert jnp.allclose(var2, jnp.exp(lv), atol=1e-6, rtol=1e-6)

    print("KERNEL_OK")
</pallas_src>

<mosaic_0001>
module attributes {stable_mosaic.version = 11 : i64} {
  func.func @_exp_kernel(%arg0: memref<8x32xf32, #tpu.memory_space<vmem>>, %arg1: memref<8x32xf32, #tpu.memory_space<vmem>>) attributes {dimension_semantics = [], scalar_prefetch = 0 : i64, scratch_operands = 0 : i64, tpu.core_type = #tpu.core_type<tc>} {
    %c0 = arith.constant 0 : index
    %c0_0 = arith.constant 0 : index
    %0 = vector.load %arg0[%c0, %c0_0] : memref<8x32xf32, #tpu.memory_space<vmem>>, vector<8x32xf32>
    %1 = math.exp %0 : vector<8x32xf32>
    %c0_1 = arith.constant 0 : index
    %c0_2 = arith.constant 0 : index
    %2 = vector.load %arg1[%c0_1, %c0_2] : memref<8x32xf32, #tpu.memory_space<vmem>>, vector<8x32xf32>
    tpu.vector_store %arg1[%c0_1, %c0_2], %1 {strides = array<i32>} : memref<8x32xf32, #tpu.memory_space<vmem>>, vector<8x32xf32>,
    return
  }
}

</mosaic_0001>

<llo_original>
// kernel: tpu_custom_call.1
$region0: #{tpu_custom_call.1}
  #allocation0 [shape = 'u32[]', space=smem, size = 0x4, offset = 0x4, fixed_abs, tag = 'smem constant byte address 0x4 - core index']
  #allocation1 [shape = 'u32[144,128]{1,0:T(1,128)}', space=vmem, size = 0x12000, scoped, tag = 'internal scratch']
  %s0 = inlined_call_operand.hbm [shape: f32[8,32], index: 0, kind: input, shape index: {}]
  %s1 = inlined_call_operand.hbm [shape: f32[8,32], index: 1, kind: output, shape index: {}]
  %s2 = sld [smem:[#allocation0]]
  $region18: #{tpu_custom_call.1} parent=0
    _
  %s4 = ssub.s32 1, %s2
  %s5 = scalar_select 0, %s4, %s2
  $region1: #{tpu_custom_call.1} parent=0
    #allocation2 [shape = 'u8[4096]{0}', space=vmem, size = 0x1000, scoped, tag = 'input window, operand 0, single buffered']
    #allocation3 [shape = 's32[1]{0}', space=sflag, size = 0x4, scoped, tag = 'scoped memory for tpu_custom_call.1']
    #allocation4 [shape = 's32[1]{0}', space=sflag, size = 0x4, scoped, tag = 'scoped memory for tpu_custom_call.1']
    #allocation5 [shape = 'u8[4096]{0}', space=vmem, size = 0x1000, scoped, tag = 'output window, operand 0, single buffered']
    %6 = vsyncpa [#allocation3], 0
    %7 = vsyncpa [#allocation4], 0
    // Predicated region
    $region2: #{tpu_custom_call.1} parent=1 // pred_check
      _
    $region3: #{tpu_custom_call.1} parent=1 // pred_check_branch
      %9 = sbr.rel (0) target = $region5
    $region4: #{tpu_custom_call.1} parent=1 // pred_region
      %s11 = ssub.s32 128, 128
      %12 = vsyncadd [#allocation3], %s11
      %s14 = sshll.u32 [#allocation2], 4
      %s15 = int_to_ptr.vmem [resolvable:$true] %s14
      %17 = dma.hbm_to_vmem [thread:$0]  %s0, 128, %s15, [#allocation3]
    $region5: #{tpu_custom_call.1} parent=1 // pred_fallthru
      _
    // Predicated region
    $region6: #{tpu_custom_call.1} parent=1 // pred_check
      _
    $region7: #{tpu_custom_call.1} parent=1 // pred_check_branch
      %19 = sbr.rel (0) target = $region9
    $region8: #{tpu_custom_call.1} parent=1 // pred_region
      %20 = dma.done [#allocation3], 128
    $region9: #{tpu_custom_call.1} parent=1 // pred_fallthru
      _
    %v21 = vld [vmem:[#allocation2] sm:$0xff]
    %v22 = vmul.f32 %v21, 1.442695
    %v23 = vpow.pop %v22
    %vm24 = vcmask 261120
    %25 = vst.msk [vmem:[#allocation5] sm:$0xff] %vm24, %v23
    // Predicated region
    $region10: #{tpu_custom_call.1} parent=1 // pred_check
      _
    $region11: #{tpu_custom_call.1} parent=1 // pred_check_branch
      %27 = sbr.rel (0) target = $region13
    $region12: #{tpu_custom_call.1} parent=1 // pred_region
      %s29 = ssub.s32 128, 128
      %30 = vsyncadd [#allocation4], %s29
      %s32 = sshll.u32 [#allocation5], 4
      %s33 = int_to_ptr.vmem [resolvable:$true] %s32
      %35 = dma.vmem_to_hbm [thread:$0]  %s33, 128, %s1, [#allocation4]
    $region13: #{tpu_custom_call.1} parent=1 // pred_fallthru
      _
    // Predicated region
    $region14: #{tpu_custom_call.1} parent=1 // pred_check
      _
    $region15: #{tpu_custom_call.1} parent=1 // pred_check_branch
      %37 = sbr.rel (0) target = $region17
    $region16: #{tpu_custom_call.1} parent=1 // pred_region
      %38 = dma.done [#allocation4], 128
    $region17: #{tpu_custom_call.1} parent=1 // pred_fallthru
      _
    %39 = vsyncpa [#allocation3], 1
    %40 = vsyncpa [#allocation4], 1

</llo_original>
